<compile_context>
chip_gen: v5e
topology: v5e:2x2
jax: 0.10.0
libtpu: 0.0.40
codegen_flags: <defaults>
</compile_context>

<pallas_src>
import math
import functools

import jax
import jax.numpy as jnp
from jax import lax
from jax.experimental import pallas as pl
from jax.experimental.pallas import tpu as pltpu


# ----------------------------------------------------------------------------
# Parameter setup (glue): sinusoidal positional-encoding buffer, exactly as the
# PyTorch __init__ builds it.  Shape: (max_len, 1, d_model).
# ----------------------------------------------------------------------------
def make_positional_encoding(d_model: int, max_len: int = 5000) -> jnp.ndarray:
    position = jnp.arange(0, max_len, dtype=jnp.float32)[:, None]            # (L, 1)
    div_term = jnp.exp(
        jnp.arange(0, d_model, 2, dtype=jnp.float32) * (-math.log(10000.0) / d_model)
    )                                                                        # (D/2,)
    pe = jnp.zeros((max_len, d_model), dtype=jnp.float32)
    pe = pe.at[:, 0::2].set(jnp.sin(position * div_term))
    pe = pe.at[:, 1::2].set(jnp.cos(position * div_term))
    return pe[:, None, :]                                                    # (L, 1, D)


# ----------------------------------------------------------------------------
# int32 helpers for an in-kernel counter-based PRNG (pure jnp ops -> lowers on
# Mosaic AND in TPU-interpret mode; no stateful pltpu.prng_* needed).
# ----------------------------------------------------------------------------
def _i32(c: int):
    c &= 0xFFFFFFFF
    if c >= (1 << 31):
        c -= 1 << 32
    return jnp.int32(c)


def _lsr(x, k: int):
    # Logical shift-right of int32 bit patterns (mask off the sign extension).
    return (x >> k) & jnp.int32((1 << (32 - k)) - 1)


def _mix31(x):
    # lowbias32-style integer finalizer; returns well-mixed values in [0, 2^31).
    x = x ^ _lsr(x, 16)
    x = x * _i32(0x7FEB352D)
    x = x ^ _lsr(x, 15)
    x = x * _i32(0x846CA68B)
    x = x ^ _lsr(x, 16)
    return x & jnp.int32(0x7FFFFFFF)


# ----------------------------------------------------------------------------
# Pallas kernel: one sequence-tile of  y = dropout(x + pe, p)
#   x_ref : (TS, B, D)    pe_ref : (TS, 1, D)    o_ref : (TS, B, D)
# ----------------------------------------------------------------------------
def _pe_dropout_kernel(seed_ref, x_ref, pe_ref, o_ref, *, p: float, threshold: int):
    y = x_ref[...].astype(jnp.float32) + pe_ref[...].astype(jnp.float32)

    if p > 0.0:
        ts, b, d = x_ref.shape
        # Global element index (tiling-invariant) -> independent bits per tile
        # without any stateful PRNG / per-block reseeding.
        s_loc = lax.broadcasted_iota(jnp.int32, (ts, b, d), 0)
        b_idx = lax.broadcasted_iota(jnp.int32, (ts, b, d), 1)
        d_idx = lax.broadcasted_iota(jnp.int32, (ts, b, d), 2)
        s_glob = s_loc + pl.program_id(0) * ts
        flat = (s_glob * b + b_idx) * d + d_idx

        seed = seed_ref[0]
        h = flat * _i32(0x9E3779B1) + seed * _i32(0x85EBCA77)
        r = _mix31(h)                                  # uniform in [0, 2^31)
        keep = r >= jnp.int32(threshold)               # keep prob = 1 - p
        scale = jnp.float32(1.0 / (1.0 - p))
        y = jnp.where(keep, y * scale, jnp.float32(0.0))

    o_ref[...] = y.astype(o_ref.dtype)


def _pick_block_rows(S: int, B: int, D: int, itemsize: int,
                     target_bytes: int = 4 << 20) -> int:
    # ~4 MiB x-tiles: big enough to amortize the ~0.35 us per-grid-step
    # overhead, small enough that double-buffered x/out (+ pe) stays well under
    # v7x's 64 MiB VMEM per TensorCore.
    rows = max(1, target_bytes // max(1, B * D * itemsize))
    return int(min(rows, S))


def positional_encoding_forward(x, pe, *, p=0.1, train=True, seed=0,
                                block_rows=None):
    """x: (S, B, D); pe: (max_len, 1, D) with max_len >= S."""
    S, B, D = x.shape
    p_eff = float(p) if train else 0.0
    if p_eff >= 1.0:                      # nn.Dropout(p=1) zeroes everything
        return jnp.zeros_like(x)

    if block_rows is None:
        block_rows = _pick_block_rows(S, B, D, jnp.dtype(x.dtype).itemsize)
    ts = int(min(block_rows, S))
    grid = (pl.cdiv(S, ts),)

    seed_arr = jnp.asarray([seed], dtype=jnp.int32)
    threshold = min(int(p_eff * (1 << 31)), (1 << 31) - 1)

    kernel = functools.partial(_pe_dropout_kernel, p=p_eff, threshold=threshold)

    grid_spec = pltpu.PrefetchScalarGridSpec(
        num_scalar_prefetch=1,            # seed lands in SMEM
        grid=grid,
        in_specs=[
            pl.BlockSpec((ts, B, D), lambda i, seed_ref: (i, 0, 0)),  # x tile
            pl.BlockSpec((ts, 1, D), lambda i, seed_ref: (i, 0, 0)),  # pe rows (no host slice)
        ],
        out_specs=pl.BlockSpec((ts, B, D), lambda i, seed_ref: (i, 0, 0)),
    )

    return pl.pallas_call(
        kernel,
        out_shape=jax.ShapeDtypeStruct((S, B, D), x.dtype),
        grid_spec=grid_spec,
        compiler_params=pltpu.CompilerParams(
            dimension_semantics=("parallel",),   # shard across v7x's 2 TCs
            vmem_limit_bytes=64 << 20,
        ),
    )(seed_arr, x, pe)


if __name__ == "__main__":
    # Small shapes consistent with the module's forward: x is (seq, batch, d_model).
    S, B, D = 16, 2, 32
    dropout_p = 0.2

    key = jax.random.PRNGKey(0)
    x = jax.random.normal(key, (S, B, D), dtype=jnp.float32)
    pe = make_positional_encoding(d_model=D, max_len=5000)

    # Eval mode (dropout = identity); block_rows=8 -> a 2-step grid gets exercised.
    y_eval = jax.block_until_ready(
        positional_encoding_forward(x, pe, p=dropout_p, train=False, block_rows=8))
    ref = x + pe[:S]
    assert jnp.allclose(y_eval, ref, atol=1e-6), "eval-mode mismatch vs reference"

    # Train mode (stochastic dropout inside the kernel, 2 grid steps).
    y_train = jax.block_until_ready(
        positional_encoding_forward(x, pe, p=dropout_p, train=True, seed=1234,
                                    block_rows=8))
    assert y_train.shape == (S, B, D)
    kept = y_train != 0.0
    assert bool(jnp.any(kept)) and bool(jnp.any(~kept)), "dropout mask degenerate"
    # Kept elements are scaled by 1/(1-p); dropped elements are exactly zero.
    assert jnp.allclose(jnp.where(kept, y_train, 0.0),
                        jnp.where(kept, ref / (1.0 - dropout_p), 0.0), atol=1e-5)

    print("KERNEL_OK")
</pallas_src>

<mosaic_0001>
module attributes {stable_mosaic.version = 11 : i64} {
  func.func @_pe_dropout_kernel(%arg0: i32, %arg1: memref<1xi32, #tpu.memory_space<smem>>, %arg2: memref<8x2x32xf32, #tpu.memory_space<vmem>>, %arg3: memref<8x1x32xf32, #tpu.memory_space<vmem>>, %arg4: memref<8x2x32xf32, #tpu.memory_space<vmem>>) attributes {dimension_semantics = [#tpu.dimension_semantics<parallel>], iteration_bounds = array<i64: 2>, scalar_prefetch = 1 : i64, scratch_operands = 0 : i64, tpu.core_type = #tpu.core_type<tc>, window_params = [{transform_indices = @transform_0, window_bounds = array<i64: 8, 2, 32>}, {transform_indices = @transform_1, window_bounds = array<i64: 8, 1, 32>}, {transform_indices = @transform_2, window_bounds = array<i64: 8, 2, 32>}]} {
    %c0 = arith.constant 0 : index
    %c0_0 = arith.constant 0 : index
    %c0_1 = arith.constant 0 : index
    %0 = vector.load %arg2[%c0, %c0_0, %c0_1] : memref<8x2x32xf32, #tpu.memory_space<vmem>>, vector<8x2x32xf32>
    %c0_2 = arith.constant 0 : index
    %c0_3 = arith.constant 0 : index
    %c0_4 = arith.constant 0 : index
    %1 = vector.load %arg3[%c0_2, %c0_3, %c0_4] : memref<8x1x32xf32, #tpu.memory_space<vmem>>, vector<8x1x32xf32>
    %2 = vector.broadcast %1 : vector<8x1x32xf32> to vector<8x2x32xf32>
    %3 = arith.addf %0, %2 : vector<8x2x32xf32>
    %c0_5 = arith.constant 0 : index
    %c0_6 = arith.constant 0 : index
    %c0_7 = arith.constant 0 : index
    %4 = vector.load %arg4[%c0_5, %c0_6, %c0_7] : memref<8x2x32xf32, #tpu.memory_space<vmem>>, vector<8x2x32xf32>
    tpu.vector_store %arg4[%c0_5, %c0_6, %c0_7], %3 {strides = array<i32>} : memref<8x2x32xf32, #tpu.memory_space<vmem>>, vector<8x2x32xf32>,
    return
  }
  func.func @transform_0(%arg0: i32, %arg1: memref<1xi32, #tpu.memory_space<smem>>) -> (i32, i32, i32) {
    %c0_i32 = arith.constant 0 : i32
    %c0_i32_0 = arith.constant 0 : i32
    %c0_i32_1 = arith.constant 0 : i32
    return %arg0, %c0_i32, %c0_i32_0 : i32, i32, i32
  }
  func.func @transform_1(%arg0: i32, %arg1: memref<1xi32, #tpu.memory_space<smem>>) -> (i32, i32, i32) {
    %c0_i32 = arith.constant 0 : i32
    %c0_i32_0 = arith.constant 0 : i32
    %c0_i32_1 = arith.constant 0 : i32
    return %arg0, %c0_i32, %c0_i32_0 : i32, i32, i32
  }
  func.func @transform_2(%arg0: i32, %arg1: memref<1xi32, #tpu.memory_space<smem>>) -> (i32, i32, i32) {
    %c0_i32 = arith.constant 0 : i32
    %c0_i32_0 = arith.constant 0 : i32
    %c0_i32_1 = arith.constant 0 : i32
    return %arg0, %c0_i32, %c0_i32_0 : i32, i32, i32
  }
}

</mosaic_0001>

<llo_original>
// kernel: tpu_custom_call.1
$region0: #{tpu_custom_call.1}
  #allocation0 [shape = 'u32[]', space=smem, size = 0x4, offset = 0x4, fixed_abs, tag = 'smem constant byte address 0x4 - core index']
  #allocation1 [shape = 'u32[72,128]{1,0:T(1,128)}', space=vmem, size = 0x9000, scoped, tag = 'internal scratch']
  #allocation2 [shape = 's32[1]{0}', space=sflag, size = 0x4, scoped, tag = 'scoped memory for tpu_custom_call.1']
  #allocation3 [shape = 's32[1]{0:T(128)S(6)}', space=smem, size = 0x200, scoped, tag = 'prefetched SMEM operand 0']
  %s0 = inlined_call_operand.<no memory space> [shape: s32[1], index: 0, kind: input, shape index: {}]
  %s1 = inlined_call_operand.vmem [shape: f32[16,2,32], index: 1, kind: input, shape index: {}]
  %s2 = inlined_call_operand.vmem [shape: f32[5000,1,32], index: 2, kind: input, shape index: {}]
  %s3 = inlined_call_operand.hbm [shape: f32[16,2,32], index: 3, kind: output, shape index: {}]
  %s4 = sld [smem:[#allocation0]]
  $region41: #{tpu_custom_call.1} parent=0
    _
  %s6 = ssub.s32 1, %s4
  %s7 = scalar_select 0, %s6, %s4
  %8 = sst [smem:[#allocation3]] %s0
  $region1: #{tpu_custom_call.1} parent=0
    #allocation4 [shape = 'u8[16384]{0}', space=vmem, size = 0x4000, scoped, tag = 'output window, operand 0']
    #allocation5 [shape = 's32[2]{0}', space=sflag, size = 0x8, scoped, tag = 'scoped memory for tpu_custom_call.1']
    %9 = vsyncpa [#allocation5], 0
    %s10 = scalar_lea.sflag [#allocation5], 1
    %11 = vsyncpa %s10, 0
    loop: start=0, step=1, limit=4
    $region2: #{tpu_custom_call.1} parent=1 // loop_pre_header
      _
    $region3: #{tpu_custom_call.1} parent=1 // loop_header
      %s13 = sphi 0, %s17
      %p14 = scmp.ge.s32.totalorder %s13, 4
      %s23 = sphi 0, %s25
      %s26 = sphi 0, %s23
      %s27 = sphi 0, %s26
      %s43 = sphi 0, %s27
      %s49 = sphi 0, %s51
      %s52 = sphi 0, %s49
      %s53 = sphi 0, %s52
      %s69 = sphi 0, %s53
      %s75 = sphi 0, %s77
      %s78 = sphi 0, %s75
      %s79 = sphi 0, %s78
      %s95 = sphi 0, %s79
    $region4: #{tpu_custom_call.1} parent=1 // loop_header_branch
      %16 = sbr.rel (%p14) target = $region8
    $region5: #{tpu_custom_call.1} parent=1 // loop_body
      %s18 = ssub.s32 %s13, 1
      %s19 = ssub.s32 %s13, 2
      %s20 = sadd.s32 %s13, 1
      %s21 = ssub.s32 %s13, %s20
      %p22 = scmp.eq.s32.totalorder %s21, 0
      %s24 = sadd.s32 %s23, 1
      %s25 = scalar_select %p22, %s23, %s24
      %p28 = pneg %p22
      %p29 = scmp.eq.s32.totalorder %s13, 1
      %p30 = por %p28, %p29
      %p31 = scmp.ne.s32.totalorder %s23, %s26
      %p32 = scmp.eq.s32.totalorder %s13, 0
      %p33 = por %p31, %p32
      %p34 = scmp.ne.s32.totalorder %s23, %s26
      %p35 = scmp.eq.s32.totalorder %s18, 1
      %p36 = por %p34, %p35
      %p37 = scmp.ne.s32.totalorder %s26, %s27
      %p38 = scmp.eq.s32.totalorder %s18, 0
      %p39 = por %p37, %p38
      %p40 = scmp.ne.s32.totalorder %s26, %s27
      %p41 = scmp.eq.s32.totalorder %s19, 1
      %p42 = por %p40, %p41
      %p44 = scmp.ne.s32.totalorder %s27, %s43
      %p45 = scmp.eq.s32.totalorder %s19, 0
      %p46 = por %p44, %p45
      %s47 = ssub.s32 %s13, %s20
      %p48 = scmp.eq.s32.totalorder %s47, 0
      %s50 = sadd.s32 %s49, 1
      %s51 = scalar_select %p48, %s49, %s50
      %p54 = pneg %p48
      %p55 = scmp.eq.s32.totalorder %s13, 1
      %p56 = por %p54, %p55
      %p57 = scmp.ne.s32.totalorder %s49, %s52
      %p58 = scmp.eq.s32.totalorder %s13, 0
      %p59 = por %p57, %p58
      %p60 = scmp.ne.s32.totalorder %s49, %s52
      %p61 = scmp.eq.s32.totalorder %s18, 1
      %p62 = por %p60, %p61
      %p63 = scmp.ne.s32.totalorder %s52, %s53
      %p64 = scmp.eq.s32.totalorder %s18, 0
      %p65 = por %p63, %p64
      %p66 = scmp.ne.s32.totalorder %s52, %s53
      %p67 = scmp.eq.s32.totalorder %s19, 1
      %p68 = por %p66, %p67
      %p70 = scmp.ne.s32.totalorder %s53, %s69
      %p71 = scmp.eq.s32.totalorder %s19, 0
      %p72 = por %p70, %p71
      %s73 = ssub.s32 %s13, %s20
      %p74 = scmp.eq.s32.totalorder %s73, 0
      %s76 = sadd.s32 %s75, 1
      %s77 = scalar_select %p74, %s75, %s76
      %p80 = pneg %p74
      %p81 = scmp.eq.s32.totalorder %s13, 1
      %p82 = por %p80, %p81
      %p83 = scmp.ne.s32.totalorder %s75, %s78
      %p84 = scmp.eq.s32.totalorder %s13, 0
      %p85 = por %p83, %p84
      %p86 = scmp.ne.s32.totalorder %s75, %s78
      %p87 = scmp.eq.s32.totalorder %s18, 1
      %p88 = por %p86, %p87
      %p89 = scmp.ne.s32.totalorder %s78, %s79
      %p90 = scmp.eq.s32.totalorder %s18, 0
      %p91 = por %p89, %p90
      %p92 = scmp.ne.s32.totalorder %s78, %s79
      %p93 = scmp.eq.s32.totalorder %s19, 1
      %p94 = por %p92, %p93
      %p96 = scmp.ne.s32.totalorder %s79, %s95
      %p97 = scmp.eq.s32.totalorder %s19, 0
      %p98 = por %p96, %p97
      %p99 = scmp.le.s32.totalorder 1, %s13
      %p100 = scmp.lt.s32.totalorder %s13, 3
      %p101 = pnand %p99, %p100
      %p102 = pneg %p101
      // Predicated region
      $region9: #{tpu_custom_call.1} parent=5 // pred_check
        _
      $region10: #{tpu_custom_call.1} parent=5 // pred_check_branch
        %104 = sbr.rel (%p101) target = $region12
      $region11: #{tpu_custom_call.1} parent=5 // pred_region
        %s105 = ssub.s32 %s13, 1
      $region12: #{tpu_custom_call.1} parent=5 // pred_fallthru
        _
      %p106 = scmp.lt.s32.totalorder %s13, 2
      // Predicated region
      $region13: #{tpu_custom_call.1} parent=5 // pred_check
        %p107 = pneg %p106
      $region14: #{tpu_custom_call.1} parent=5 // pred_check_branch
        %109 = sbr.rel (%p107) target = $region16
      $region15: #{tpu_custom_call.1} parent=5 // pred_region
        // Predicated region
        $region17: #{tpu_custom_call.1} parent=15 // pred_check
          %p110 = pneg %p33
        $region18: #{tpu_custom_call.1} parent=15 // pred_check_branch
          %112 = sbr.rel (%p110) target = $region20
        $region19: #{tpu_custom_call.1} parent=15 // pred_region
          %s113 = smul.u32 8, %s13
          %p114 = scmp.lt.s32.totalorder %s113, 15
          %s115 = scalar_select %p114, %s113, 15
          %s116 = smul.addr %s115, 2
          %s117 = scalar_lea.vmem %s1, %s116
          %s118 = smul.u32 8, %s13
        $region20: #{tpu_custom_call.1} parent=15 // pred_fallthru
          _
        // Predicated region
        $region21: #{tpu_custom_call.1} parent=15 // pred_check
          %p119 = pneg %p59
        $region22: #{tpu_custom_call.1} parent=15 // pred_check_branch
          %121 = sbr.rel (%p119) target = $region24
        $region23: #{tpu_custom_call.1} parent=15 // pred_region
          %s122 = smul.u32 8, %s13
          %p123 = scmp.lt.s32.totalorder %s122, 4999
          %s124 = scalar_select %p123, %s122, 4999
          %s125 = scalar_lea.vmem %s2, %s124
          %s126 = smul.u32 8, %s13
        $region24: #{tpu_custom_call.1} parent=15 // pred_fallthru
          _
      $region16: #{tpu_custom_call.1} parent=5 // pred_fallthru
        _
      %p127 = scmp.le.s32.totalorder 1, %s13
      %p128 = scmp.lt.s32.totalorder %s13, 3
      %p129 = pnand %p127, %p128
      %p130 = pneg %p129
      // Predicated region
      $region25: #{tpu_custom_call.1} parent=5 // pred_check
        _
      $region26: #{tpu_custom_call.1} parent=5 // pred_check_branch
        %132 = sbr.rel (%p129) target = $region28
      $region27: #{tpu_custom_call.1} parent=5 // pred_region
        %s133 = ssub.s32 %s13, 1
        %s134 = smul.u32 8, %s18
        %p135 = scmp.lt.s32.totalorder %s134, 15
        %s136 = scalar_select %p135, %s134, 15
        %s137 = smul.addr %s136, 2
        %s138 = scalar_lea.vmem %s1, %s137
        %p139 = pneg %p39
        %p140 = pneg %p36
        %s141 = smul.u32 8, %s18
        %p142 = scmp.lt.s32.totalorder %s141, 4999
        %s143 = scalar_select %p142, %s141, 4999
        %s144 = scalar_lea.vmem %s2, %s143
        %p145 = pneg %p65
        %p146 = pneg %p62
        %p147 = pneg %p91
        %p148 = pneg %p88
        %s149 = sand.u32 %s78, 1
        %s150 = scalar_lea.sflag [#allocation5], %s149
        %s151 = sand.u32 %s78, 1
        %s152 = smul.addr %s151, 16
        %s153 = scalar_lea.vmem [#allocation4], %s152
        %s154 = smul.u32 8, %s18
        %p155 = scmp.lt.s32.totalorder %s154, 15
        %s156 = scalar_select %p155, %s154, 15
        %s157 = smul.addr %s156, 2
        %s158 = scalar_lea.vmem %s1, %s157
        %s159 = smul.u32 8, %s18
        %s160 = smul.u32 8, %s18
        %p161 = scmp.lt.s32.totalorder %s160, 4999
        %s162 = scalar_select %p161, %s160, 4999
        %s163 = scalar_lea.vmem %s2, %s162
        %s164 = smul.u32 8, %s18
        %s165 = smul.u32 8, %s18
        %v166 = vld [vmem:[%s158] sm:$0x3]
        %v167 = vld [vmem:[%s158 + $0x2] sm:$0x3]
        %v168 = vld [vmem:[%s158 + $0x4] sm:$0x3]
        %v169 = vld [vmem:[%s158 + $0x6] sm:$0x3]
        %v170 = vld [vmem:[%s158 + $0x8] sm:$0x3]
        %v171 = vld [vmem:[%s158 + $0xa] sm:$0x3]
        %v172 = vld [vmem:[%s158 + $0xc] sm:$0x3]
        %v173 = vld [vmem:[%s158 + $0xe] sm:$0x3]
        %v174 = vld [vmem:[%s163] sm:$0x1]
        %v175 = vld [vmem:[%s163 + $0x1] sm:$0x1]
        %v176 = vld [vmem:[%s163 + $0x2] sm:$0x1]
        %v177 = vld [vmem:[%s163 + $0x3] sm:$0x1]
        %v178 = vld [vmem:[%s163 + $0x4] sm:$0x1]
        %v179 = vld [vmem:[%s163 + $0x5] sm:$0x1]
        %v180 = vld [vmem:[%s163 + $0x6] sm:$0x1]
        %v181 = vld [vmem:[%s163 + $0x7] sm:$0x1]
        %v190 = vperm.slane %v174, 0
        %v191 = vperm.slane %v175, 0
        %v192 = vperm.slane %v176, 0
        %v193 = vperm.slane %v177, 0
        %v194 = vperm.slane %v178, 0
        %v195 = vperm.slane %v179, 0
        %v196 = vperm.slane %v180, 0
        %v197 = vperm.slane %v181, 0
        %v206 = vadd.f32 %v166, %v190
        %v207 = vadd.f32 %v167, %v191
        %v208 = vadd.f32 %v168, %v192
        %v209 = vadd.f32 %v169, %v193
        %v210 = vadd.f32 %v170, %v194
        %v211 = vadd.f32 %v171, %v195
        %v212 = vadd.f32 %v172, %v196
        %v213 = vadd.f32 %v173, %v197
        %vm214 = vcmask 254976
        %215 = vst.msk [vmem:[%s153] sm:$0x3] %vm214, %v206
        %216 = vst.msk [vmem:[%s153 + $0x2] sm:$0x3] %vm214, %v207
        %217 = vst.msk [vmem:[%s153 + $0x4] sm:$0x3] %vm214, %v208
        %218 = vst.msk [vmem:[%s153 + $0x6] sm:$0x3] %vm214, %v209
        %219 = vst.msk [vmem:[%s153 + $0x8] sm:$0x3] %vm214, %v210
        %220 = vst.msk [vmem:[%s153 + $0xa] sm:$0x3] %vm214, %v211
        %221 = vst.msk [vmem:[%s153 + $0xc] sm:$0x3] %vm214, %v212
        %222 = vst.msk [vmem:[%s153 + $0xe] sm:$0x3] %vm214, %v213
        %s223 = sand.u32 %s78, 1
        %s224 = scalar_lea.sflag [#allocation5], %s223
        %s225 = sand.u32 %s78, 1
        %s226 = smul.addr %s225, 16
        %s227 = scalar_lea.vmem [#allocation4], %s226
        // Predicated region
        $region29: #{tpu_custom_call.1} parent=27 // pred_check
          %p228 = pneg %p88
        $region30: #{tpu_custom_call.1} parent=27 // pred_check_branch
          %230 = sbr.rel (%p228) target = $region32
        $region31: #{tpu_custom_call.1} parent=27 // pred_region
          %s231 = smul.u32 8, %s18
          %233 = vsyncadd %s224, 0
          %s234 = smul.addr %s231, 2
          %s235 = scalar_lea.hbm %s3, %s234
          %s236 = sshll.u32 %s227, 4
          %s237 = int_to_ptr.vmem [resolvable:$true] %s236
          %s238 = sshll.u32 %s235, 4
          %s239 = int_to_ptr.hbm [resolvable:$true] %s238
          %244 = dma.vmem_to_hbm [thread:$0]  %s237, 256, %s239, %s224, 32, 32, 2
        $region32: #{tpu_custom_call.1} parent=27 // pred_fallthru
          _
      $region28: #{tpu_custom_call.1} parent=5 // pred_fallthru
        _
      %p245 = scmp.le.s32.totalorder 2, %s13
      // Predicated region
      $region33: #{tpu_custom_call.1} parent=5 // pred_check
        %p246 = pneg %p245
      $region34: #{tpu_custom_call.1} parent=5 // pred_check_branch
        %248 = sbr.rel (%p246) target = $region36
      $region35: #{tpu_custom_call.1} parent=5 // pred_region
        %s249 = ssub.s32 %s13, 2
        // Predicated region
        $region37: #{tpu_custom_call.1} parent=35 // pred_check
          %p250 = pneg %p94
        $region38: #{tpu_custom_call.1} parent=35 // pred_check_branch
          %252 = sbr.rel (%p250) target = $region40
        $region39: #{tpu_custom_call.1} parent=35 // pred_region
          %s253 = sand.u32 %s79, 1
          %s254 = scalar_lea.sflag [#allocation5], %s253
          %s255 = sand.u32 %s79, 1
          %s256 = smul.addr %s255, 16
          %s257 = scalar_lea.vmem [#allocation4], %s256
          %259 = dma.done %s254, 256
        $region40: #{tpu_custom_call.1} parent=35 // pred_fallthru
          _
      $region36: #{tpu_custom_call.1} parent=5 // pred_fallthru
        _
    $region6: #{tpu_custom_call.1} parent=1 // loop_footer
      %s17 = sadd.s32 1, %s13
    $region7: #{tpu_custom_call.1} parent=1 // loop_footer_branch
      %12 = sbr.rel target = $region3
    $region8: #{tpu_custom_call.1} parent=1 // loop_exit
      _
    %260 = vsyncpa [#allocation5], 1
    %s261 = scalar_lea.sflag [#allocation5], 1
    %262 = vsyncpa %s261, 1

</llo_original>
